<compile_context>
chip_gen: v5e
topology: v5e:2x2
jax: 0.10.0
libtpu: 0.0.40
codegen_flags: <defaults>
</compile_context>

<pallas_src>
import functools

import jax
import jax.numpy as jnp
from jax.experimental import pallas as pl
from jax.experimental.pallas import tpu as pltpu


def _round_up(x: int, m: int) -> int:
    return ((x + m - 1) // m) * m


def _cross_entropy_kernel(col_ref, logits_ref, target_ref, out_ref, *, n_rows, tile_n):
    # col_ref:    (1, C) int32 lane indices, VMEM (constant across grid)
    # logits_ref: (tile_n, C) input dtype, VMEM
    # target_ref: (tile_n, 1) int32, VMEM
    # out_ref:    (1, 1) f32, SMEM  -- this tile's partial sum
    pid = pl.program_id(0)

    x = logits_ref[...].astype(jnp.float32)          # in-kernel upcast
    tgt = target_ref[...]                            # (tile_n, 1) int32
    col = col_ref[...]                               # (1, C) int32

    # Gather the target logit directly from the raw tile (single select pass).
    tgt_x = jnp.sum(jnp.where(col == tgt, x, 0.0), axis=-1, keepdims=True)   # (tile_n, 1)

    # Numerically stable logsumexp; `x - m` only feeds exp and dies immediately.
    m = jnp.max(x, axis=-1, keepdims=True)                                   # (tile_n, 1)
    lse = m + jnp.log(jnp.sum(jnp.exp(x - m), axis=-1, keepdims=True))       # (tile_n, 1)

    per_example = lse - tgt_x                                                # (tile_n, 1)

    # Mask rows beyond the true batch size (partial last tile -> stale VMEM).
    # Must stay a select: garbage rows may hold NaN/Inf after max/exp/log.
    row = jax.lax.broadcasted_iota(jnp.int32, per_example.shape, dimension=0)
    valid = (pid * tile_n + row) < n_rows
    per_example = jnp.where(valid, per_example, 0.0)

    out_ref[0, 0] = jnp.sum(per_example)


def _vmem_budget():
    """(per-buffer logits budget, scoped vmem limit) tuned per TPU generation."""
    try:
        vmem_cap = int(pltpu.get_tpu_info().vmem_capacity_bytes)
    except Exception:
        vmem_cap = 64 * 1024 * 1024
    if vmem_cap >= 100 * 1024 * 1024:
        # v5e / v6e: 128 MiB physical VMEM.
        return 6 * 1024 * 1024, 64 * 1024 * 1024
    # v7x: 64 MiB physical per TC -- keep headroom for double buffering + f32 temps.
    return 4 * 1024 * 1024, 48 * 1024 * 1024


def _choose_tile_n(n: int, c: int, budget: int) -> int:
    # Size the row tile against the VMEM byte budget only (no artificial row
    # cap) so small-C shapes still reach multi-MiB blocks and sit near the HBM
    # roofline.  Budget is measured against the f32 working set per row.
    per_row = _round_up(c, 128) * 4
    rows = max(8, (budget // per_row) // 8 * 8)
    return min(rows, _round_up(n, 8))


def cross_entropy_loss(logits: jax.Array, target: jax.Array, *, tile_n=None) -> jax.Array:
    """Pallas equivalent of nn.CrossEntropyLoss()(logits, target) (mean reduction)."""
    n, c = logits.shape
    itemsize = jnp.dtype(logits.dtype).itemsize
    budget, vmem_limit = _vmem_budget()
    if tile_n is None:
        tile_n = _choose_tile_n(n, c, budget)
    tile_n = min(_round_up(int(tile_n), 8), _round_up(n, 8))
    grid_n = pl.cdiv(n, tile_n)

    tgt2d = target.astype(jnp.int32).reshape(n, 1)
    col_row = jnp.arange(c, dtype=jnp.int32).reshape(1, c)

    kernel = functools.partial(_cross_entropy_kernel, n_rows=n, tile_n=tile_n)

    partials = pl.pallas_call(
        kernel,
        grid=(grid_n,),
        out_shape=jax.ShapeDtypeStruct((grid_n, 1), jnp.float32),
        in_specs=[
            pl.BlockSpec((1, c), lambda i: (0, 0)),        # lane indices (VMEM resident)
            pl.BlockSpec((tile_n, c), lambda i: (i, 0)),   # logits tile (full C)
            pl.BlockSpec((tile_n, 1), lambda i: (i, 0)),   # matching target column
        ],
        out_specs=pl.BlockSpec((1, 1), lambda i: (i, 0),
                               memory_space=pltpu.MemorySpace.SMEM),
        compiler_params=pltpu.CompilerParams(
            dimension_semantics=("parallel",),
            vmem_limit_bytes=vmem_limit,
        ),
        cost_estimate=pl.CostEstimate(
            flops=6 * n * c,
            transcendentals=n * c + n,
            bytes_accessed=n * c * itemsize + n * 4 + c * 4 + grid_n * 4,
        ),
    )(col_row, logits, tgt2d)

    return jnp.sum(partials) / jnp.float32(n)


if __name__ == "__main__":
    key = jax.random.PRNGKey(0)
    k1, k2, k3, k4 = jax.random.split(key, 4)

    # CIFAR-100-style small shapes: batch=8, num_classes=100.
    N, C = 8, 100
    logits = jax.random.normal(k1, (N, C), dtype=jnp.float32)
    target = jax.random.randint(k2, (N,), 0, C, dtype=jnp.int32)

    loss = cross_entropy_loss(logits, target)
    jax.block_until_ready(loss)

    ref = jnp.mean(
        jax.nn.logsumexp(logits, axis=-1)
        - jnp.take_along_axis(logits, target[:, None], axis=-1)[:, 0]
    )
    assert jnp.allclose(loss, ref, atol=1e-5, rtol=1e-5), (loss, ref)

    # Exercise the gridded path: multiple tiles + masked partial last tile.
    N2, C2 = 37, 100
    logits2 = jax.random.normal(k3, (N2, C2), dtype=jnp.float32)
    target2 = jax.random.randint(k4, (N2,), 0, C2, dtype=jnp.int32)
    loss2 = cross_entropy_loss(logits2, target2, tile_n=16)
    jax.block_until_ready(loss2)
    ref2 = jnp.mean(
        jax.nn.logsumexp(logits2, axis=-1)
        - jnp.take_along_axis(logits2, target2[:, None], axis=-1)[:, 0]
    )
    assert jnp.allclose(loss2, ref2, atol=1e-5, rtol=1e-5), (loss2, ref2)

    print("KERNEL_OK")
</pallas_src>

<mosaic_0001>
module attributes {stable_mosaic.version = 11 : i64} {
  func.func @_cross_entropy_kernel(%arg0: i32, %arg1: memref<1x100xi32, #tpu.memory_space<vmem>>, %arg2: memref<8x100xf32, #tpu.memory_space<vmem>>, %arg3: memref<8x1xi32, #tpu.memory_space<vmem>>, %arg4: memref<1x1xf32, #tpu.memory_space<smem>>) attributes {dimension_semantics = [#tpu.dimension_semantics<parallel>], iteration_bounds = array<i64: 1>, scalar_prefetch = 0 : i64, scratch_operands = 0 : i64, tpu.core_type = #tpu.core_type<tc>, window_params = [{pipeline_mode = #tpu.pipeline_mode<synchronous>, transform_indices = @transform_0, window_bounds = array<i64: 1, 100>}, {transform_indices = @transform_1, window_bounds = array<i64: 8, 100>}, {transform_indices = @transform_2, window_bounds = array<i64: 8, 1>}, {transform_indices = @transform_3, window_bounds = array<i64: 1, 1>}]} {
    %c0 = arith.constant 0 : index
    %c0_0 = arith.constant 0 : index
    %0 = vector.load %arg2[%c0, %c0_0] : memref<8x100xf32, #tpu.memory_space<vmem>>, vector<8x100xf32>
    %c0_1 = arith.constant 0 : index
    %c0_2 = arith.constant 0 : index
    %1 = vector.load %arg3[%c0_1, %c0_2] : memref<8x1xi32, #tpu.memory_space<vmem>>, vector<8x1xi32>
    %c0_3 = arith.constant 0 : index
    %c0_4 = arith.constant 0 : index
    %2 = vector.load %arg1[%c0_3, %c0_4] : memref<1x100xi32, #tpu.memory_space<vmem>>, vector<1x100xi32>
    %3 = vector.broadcast %2 : vector<1x100xi32> to vector<8x100xi32>
    %4 = vector.broadcast %1 : vector<8x1xi32> to vector<8x100xi32>
    %5 = arith.cmpi eq, %3, %4 : vector<8x100xi32>
    %cst = arith.constant 0.000000e+00 : f32
    %6 = vector.broadcast %cst : f32 to vector<8x100xf32>
    %7 = arith.select %5, %0, %6 : vector<8x100xi1>, vector<8x100xf32>
    %cst_5 = arith.constant dense<0.000000e+00> : vector<8xf32>
    %8 = vector.multi_reduction <add>, %7, %cst_5 [1] : vector<8x100xf32> to vector<8xf32>
    %9 = vector.shape_cast %8 : vector<8xf32> to vector<8x1xf32>
    %cst_6 = arith.constant dense<0xFF800000> : vector<8xf32>
    %10 = vector.multi_reduction <maximumf>, %0, %cst_6 [1] : vector<8x100xf32> to vector<8xf32>
    %11 = vector.shape_cast %10 : vector<8xf32> to vector<8x1xf32>
    %12 = vector.broadcast %11 : vector<8x1xf32> to vector<8x100xf32>
    %13 = arith.subf %0, %12 : vector<8x100xf32>
    %14 = math.exp %13 : vector<8x100xf32>
    %cst_7 = arith.constant dense<0.000000e+00> : vector<8xf32>
    %15 = vector.multi_reduction <add>, %14, %cst_7 [1] : vector<8x100xf32> to vector<8xf32>
    %16 = vector.shape_cast %15 : vector<8xf32> to vector<8x1xf32>
    %17 = math.log %16 : vector<8x1xf32>
    %18 = arith.addf %11, %17 : vector<8x1xf32>
    %19 = arith.subf %18, %9 : vector<8x1xf32>
    %20 = tpu.iota {dimensions = array<i32: 0>} : vector<8x1xi32>
    %c8_i32 = arith.constant 8 : i32
    %21 = arith.muli %arg0, %c8_i32 : i32
    %22 = vector.broadcast %21 : i32 to vector<8x1xi32>
    %23 = arith.addi %22, %20 : vector<8x1xi32>
    %c8_i32_8 = arith.constant 8 : i32
    %24 = vector.broadcast %c8_i32_8 : i32 to vector<8x1xi32>
    %25 = arith.cmpi slt, %23, %24 : vector<8x1xi32>
    %cst_9 = arith.constant 0.000000e+00 : f32
    %26 = vector.broadcast %cst_9 : f32 to vector<8x1xf32>
    %27 = arith.select %25, %19, %26 : vector<8x1xi1>, vector<8x1xf32>
    %28 = vector.shape_cast %27 : vector<8x1xf32> to vector<1x8x1xf32>
    %cst_10 = arith.constant dense<0.000000e+00> : vector<1xf32>
    %29 = vector.multi_reduction <add>, %28, %cst_10 [1, 2] : vector<1x8x1xf32> to vector<1xf32>
    %30 = vector.shape_cast %29 : vector<1xf32> to vector<1x1x1xf32>
    %31 = vector.extract %30[0, 0, 0] : f32 from vector<1x1x1xf32>
    %c0_11 = arith.constant 0 : index
    %c0_12 = arith.constant 0 : index
    %32 = memref.load %arg4[%c0_11, %c0_12] : memref<1x1xf32, #tpu.memory_space<smem>>
    memref.store %31, %arg4[%c0_11, %c0_12] : memref<1x1xf32, #tpu.memory_space<smem>>
    return
  }
  func.func @transform_0(%arg0: i32) -> (i32, i32) {
    %c0_i32 = arith.constant 0 : i32
    %c0_i32_0 = arith.constant 0 : i32
    %c0_i32_1 = arith.constant 0 : i32
    return %c0_i32, %c0_i32_0 : i32, i32
  }
  func.func @transform_1(%arg0: i32) -> (i32, i32) {
    %c0_i32 = arith.constant 0 : i32
    %c0_i32_0 = arith.constant 0 : i32
    return %arg0, %c0_i32 : i32, i32
  }
  func.func @transform_2(%arg0: i32) -> (i32, i32) {
    %c0_i32 = arith.constant 0 : i32
    %c0_i32_0 = arith.constant 0 : i32
    return %arg0, %c0_i32 : i32, i32
  }
  func.func @transform_3(%arg0: i32) -> (i32, i32) {
    %c0_i32 = arith.constant 0 : i32
    %c0_i32_0 = arith.constant 0 : i32
    return %arg0, %c0_i32 : i32, i32
  }
}

</mosaic_0001>

<llo_original>
// kernel: tpu_custom_call.1
$region0: #{tpu_custom_call.1}
  #allocation0 [shape = 'u32[]', space=smem, size = 0x4, offset = 0x4, fixed_abs, tag = 'smem constant byte address 0x4 - core index']
  #allocation1 [shape = 'u32[72,128]{1,0:T(1,128)}', space=vmem, size = 0x9000, scoped, tag = 'internal scratch']
  %s0 = inlined_call_operand.vmem [shape: s32[1,100], index: 0, kind: input, shape index: {}]
  %s1 = inlined_call_operand.vmem [shape: f32[8,100], index: 1, kind: input, shape index: {}]
  %s2 = inlined_call_operand.vmem [shape: s32[8,1], index: 2, kind: input, shape index: {}]
  %s3 = inlined_call_operand.hbm [shape: f32[1,1], index: 3, kind: output, shape index: {}]
  %s4 = sld [smem:[#allocation0]]
  $region22: #{tpu_custom_call.1} parent=0
    _
  %s6 = ssub.s32 1, %s4
  %s7 = scalar_select 0, %s6, %s4
  $region1: #{tpu_custom_call.1} parent=0
    #allocation2 [shape = 'u8[512]{0}', space=smem, size = 0x200, scoped, tag = 'output window, operand 0, single buffered']
    #allocation3 [shape = 's32[1]{0}', space=sflag, size = 0x4, scoped, tag = 'scoped memory for tpu_custom_call.1']
    %8 = vsyncpa [#allocation3], 0
    // Predicated region
    $region2: #{tpu_custom_call.1} parent=1 // pred_check
      _
    $region3: #{tpu_custom_call.1} parent=1 // pred_check_branch
      %10 = sbr.rel (0) target = $region5
    $region4: #{tpu_custom_call.1} parent=1 // pred_region
      _
    $region5: #{tpu_custom_call.1} parent=1 // pred_fallthru
      _
    // Predicated region
    $region6: #{tpu_custom_call.1} parent=1 // pred_check
      _
    $region7: #{tpu_custom_call.1} parent=1 // pred_check_branch
      %12 = sbr.rel (0) target = $region9
    $region8: #{tpu_custom_call.1} parent=1 // pred_region
      _
    $region9: #{tpu_custom_call.1} parent=1 // pred_fallthru
      _
    // Predicated region
    $region10: #{tpu_custom_call.1} parent=1 // pred_check
      _
    $region11: #{tpu_custom_call.1} parent=1 // pred_check_branch
      %14 = sbr.rel (0) target = $region13
    $region12: #{tpu_custom_call.1} parent=1 // pred_region
      _
    $region13: #{tpu_custom_call.1} parent=1 // pred_fallthru
      _
    %v15 = vld [vmem:[%s1] sm:$0xff]
    %v16 = vld [vmem:[%s2] sm:$0xff]
    %v17 = vld [vmem:[%s0] sm:$0x1]
    %v18 = vperm.slane %v17, 0
    %19 = vset.pattern.permute.xlu0 0
    %20 = vperm.xlu0 %19, %v16
    %v21 = vpop.permute.xlu0 %20
    %vm22 = vcmp.eq.s32.totalorder %v18, %v21
    %v23 = vsel %vm22, %v15, 0.0
    %vm24 = vcmask 818176
    %v25 = vsel %vm24, %v23, 0.0
    %26 = vadd.xlane.f32.xlu0 %v25
    %v27 = vpop.xlane.xlu0 %26
    %v28 = vsel %vm24, %v15, -inf
    %29 = vmax.xlane.f32.xlu0 %v28
    %v30 = vpop.xlane.xlu0 %29
    %v31 = vsub.f32 %v15, %v30
    %v32 = vmul.f32 %v31, 1.442695
    %v33 = vpow.pop %v32
    %v34 = vsel %vm24, %v33, 0.0
    %35 = vadd.xlane.f32.xlu0 %v34
    %v36 = vpop.xlane.xlu0 %35
    %v37 = vlog2.pop %v36
    %v38 = vmul.f32 %v37, 0.6931472
    %v39 = vadd.f32 %v30, %v38
    %v40 = vsub.f32 %v39, %v27
    %v41 = vlaneseq
    %v42 = vshrl.u32 %v41, 7
    %s43 = smul.u32 0, 8
    %v44 = vstv %s43
    %v45 = vadd.s32 %v44, %v42
    %vm46 = vcmp.lt.s32.totalorder %v45, 8
    %v47 = vsel %vm46, %v40, 0.0
    %vm48 = vcmask 7168
    %v49 = vsel %vm48, %v47, 0.0
    %50 = vadd.xlane.f32.xlu0 %v49
    %v51 = vpop.xlane.xlu0 %50
    %v52 = vrot.slane %v51, 4
    %v53 = vadd.f32 %v51, %v52
    %v54 = vrot.slane %v53, 2
    %v55 = vadd.f32 %v53, %v54
    %v56 = vrot.slane %v55, 1
    %v57 = vadd.f32 %v55, %v56
    %s58 = vtos %v57
    %s59 = scalar_lea.smem [#allocation2], 0
    %60 = sst [smem:[%s59]] %s58
    // Predicated region
    $region14: #{tpu_custom_call.1} parent=1 // pred_check
      _
    $region15: #{tpu_custom_call.1} parent=1 // pred_check_branch
      %62 = sbr.rel (0) target = $region17
    $region16: #{tpu_custom_call.1} parent=1 // pred_region
      %64 = vsyncadd [#allocation3], 0
      %s66 = sshll.u32 %s3, 4
      %s67 = int_to_ptr.hbm [resolvable:$true] %s66
      %69 = dma.smem_to_hbm [#allocation2], 16, %s67, [#allocation3]
    $region17: #{tpu_custom_call.1} parent=1 // pred_fallthru
      _
    // Predicated region
    $region18: #{tpu_custom_call.1} parent=1 // pred_check
      _
    $region19: #{tpu_custom_call.1} parent=1 // pred_check_branch
      %71 = sbr.rel (0) target = $region21
    $region20: #{tpu_custom_call.1} parent=1 // pred_region
      %73 = dma.done [#allocation3], 16
    $region21: #{tpu_custom_call.1} parent=1 // pred_fallthru
      _
    %74 = sfence
    %75 = vsyncpa [#allocation3], 1

</llo_original>
